<compile_context>
chip_gen: v5e
topology: v5e:2x2
jax: 0.10.0
libtpu: 0.0.40
codegen_flags: <defaults>
</compile_context>

<pallas_src>
import functools

import jax
import jax.numpy as jnp
import numpy as np
from jax import lax
from jax.experimental import pallas as pl
from jax.experimental.pallas import tpu as pltpu


def _attn_kernel(x_ref, wqkv_ref, wo_ref, b_ref, mask_ref, o_ref, o_scr,
                 *, num_heads, head_dim, d_model, scale):
    """One batch-block (rows = block_b * S rows) per grid step."""
    D, H, hd = d_model, num_heads, head_dim

    x = x_ref[...]                                               # (rows, D)

    # Fused QKV projection: one full-D contraction, N = 3D on the MXU.
    qkv = jnp.dot(x, wqkv_ref[...], preferred_element_type=jnp.float32)
    qkv = qkv + b_ref[0:1, 0:3 * D]                              # (rows, 3D)

    q = qkv[:, 0:D] * scale          # fold the score scale into q once
    k = qkv[:, D:2 * D]
    v = qkv[:, 2 * D:3 * D]

    # (rows, rows) additive bias: rel-pos bias on the per-batch-element block
    # diagonal, -1e30 off-diagonal.  Added BEFORE max/exp so cross-batch
    # entries contribute exactly zero to the softmax denominator.
    mask_bias = mask_ref[...]

    for h in range(H):                                           # static, small H
        lo = h * hd
        qh = q[:, lo:lo + hd]                                    # (rows, hd)
        kh = k[:, lo:lo + hd]
        vh = v[:, lo:lo + hd]

        # Contract head_dim of BOTH operands -> no materialized kh.T.
        scores = lax.dot_general(qh, kh, (((1,), (1,)), ((), ())),
                                 preferred_element_type=jnp.float32)
        scores = scores + mask_bias                              # (rows, rows)

        m = jnp.max(scores, axis=-1, keepdims=True)
        e = jnp.exp(scores - m)
        denom = jnp.sum(e, axis=-1, keepdims=True)
        attn = e / denom                                         # exact softmax

        # Park each head's output in VMEM scratch: bounds vreg live ranges
        # and replaces the old head/batch concatenates.
        o_scr[:, lo:lo + hd] = jnp.dot(attn, vh,
                                       preferred_element_type=jnp.float32)

    # Fused output projection: one full-D contraction for the whole block.
    out = jnp.dot(o_scr[...], wo_ref[...], preferred_element_type=jnp.float32)
    out = out + b_ref[0:1, 3 * D:4 * D]
    o_ref[...] = out.astype(o_ref.dtype)


def _num_tensorcores():
    """Best-effort TensorCore count (v7x has 2 per chip); safe fallback of 1."""
    try:
        return max(1, int(getattr(jax.devices()[0], "num_cores", 1) or 1))
    except Exception:
        return 1


def _pick_block_b(batch, seq, num_cores):
    """Batch elements per grid step.

    Largest divisor of `batch` such that rows = block_b*seq <= 128 (fills the
    MXU M dimension and amortizes per-grid-step overhead on 1-TC v5e/v6e),
    the grid keeps >= num_cores steps (v7x: 2 TCs), and the (rows, D) block
    satisfies the (8,128) sublane rule (rows % 8 == 0 or block == full array).
    """
    max_bb = max(1, min(batch // max(1, num_cores), max(1, 128 // seq)))
    for cand in range(max_bb, 0, -1):
        if batch % cand:
            continue
        if (cand * seq) % 8 == 0 or cand == batch:
            return cand
    return batch   # single full-array block is always layout-legal


def cross_epoch_attention(x, params, num_heads, seq_length_max=10):
    """x: (B, S, D) float32.  params: dict from init_params."""
    B, S, D = x.shape
    head_dim = D // num_heads
    assert head_dim * num_heads == D, "d_model must be divisible by num_heads"
    scale = head_dim ** (-0.5)

    block_b = _pick_block_b(B, S, _num_tensorcores())
    rows = block_b * S

    # ---- wrapper-side packing (tiny one-time XLA glue) ----
    # Fused QKV weight (D, 3D); all four (1, D) biases in one (1, 4D) row.
    wqkv = jnp.concatenate([params["wq"], params["wk"], params["wv"]], axis=1)
    b_all = jnp.concatenate(
        [params["bq"], params["bk"], params["bv"], params["bo"]], axis=1)

    # Relative position bias (matches the PyTorch module: the index offset
    # uses the *actual* seq_len, gated on seq_len <= seq_length_max).
    if S <= seq_length_max:
        rng = jnp.arange(S)
        rel_idx = rng[None, :] - rng[:, None] + S - 1                 # (S, S)
        rel = params["pos_bias"][rel_idx].astype(jnp.float32)
    else:
        rel = jnp.zeros((S, S), dtype=jnp.float32)

    # Block-diagonal additive mask over the whole (rows, rows) score tile.
    eye = jnp.eye(block_b, dtype=bool)
    blk = jnp.repeat(jnp.repeat(eye, S, axis=0), S, axis=1)           # (rows, rows)
    mask_bias = jnp.where(blk, jnp.tile(rel, (block_b, block_b)),
                          jnp.float32(-1e30))

    # Flatten batch/seq in the wrapper (free reshape); the kernel works on
    # contiguous (rows, D) row slabs.
    x2 = x.reshape(B * S, D)

    kernel = functools.partial(
        _attn_kernel, num_heads=num_heads, head_dim=head_dim, d_model=D,
        scale=scale)

    const = lambda shape: pl.BlockSpec(shape, lambda b: (0, 0))

    # Explicit VMEM budget: double-buffered blocks + single-buffered scratch,
    # clamped to a range legal on every generation (v7x physical VMEM = 64 MiB).
    # TODO(synk): at large D, single-buffer the constant weight blocks
    # (pipeline_mode=pl.Buffered(1)) and cast them to bf16.
    est = 4 * (2 * rows * D            # x block (double-buffered)
               + 2 * rows * D          # out block
               + 2 * D * 3 * D         # Wqkv
               + 2 * D * D             # Wo
               + 2 * 4 * D             # packed biases
               + 2 * rows * rows       # block-diag mask
               + rows * D)             # scratch
    vmem_limit = int(min(max(2 * est, 32 << 20), 64 << 20))

    out2 = pl.pallas_call(
        kernel,
        out_shape=jax.ShapeDtypeStruct((B * S, D), x.dtype),
        grid_spec=pltpu.PrefetchScalarGridSpec(
            num_scalar_prefetch=0,
            grid=(B // block_b,),
            in_specs=[
                pl.BlockSpec((rows, D), lambda b: (b, 0)),   # x batch block
                const((D, 3 * D)),                           # fused Wqkv
                const((D, D)),                               # Wo
                const((1, 4 * D)),                           # packed biases
                const((rows, rows)),                         # block-diag bias/mask
            ],
            out_specs=pl.BlockSpec((rows, D), lambda b: (b, 0)),
            scratch_shapes=[pltpu.VMEM((rows, D), jnp.float32)],
        ),
        compiler_params=pltpu.CompilerParams(
            dimension_semantics=("parallel",),
            vmem_limit_bytes=vmem_limit),
    )(x2, wqkv, params["wo"], b_all, mask_bias)

    return out2.reshape(B, S, D)


def init_params(key, d_model, seq_length_max=10):
    ks = jax.random.split(key, 9)

    def lin(kw, kb):
        w = jax.random.normal(kw, (d_model, d_model), jnp.float32) * 0.02
        b = jax.random.normal(kb, (1, d_model), jnp.float32) * 0.02
        return w, b

    wq, bq = lin(ks[0], ks[1])
    wk, bk = lin(ks[2], ks[3])
    wv, bv = lin(ks[4], ks[5])
    wo, bo = lin(ks[6], ks[7])
    # PyTorch inits pos_bias to zeros; use small random values so the
    # relative-position-bias path is actually exercised (deterministic).
    pos_bias = jax.random.normal(ks[8], (2 * seq_length_max - 1,),
                                 jnp.float32) * 0.1
    return dict(wq=wq, bq=bq, wk=wk, bk=bk, wv=wv, bv=bv, wo=wo, bo=bo,
                pos_bias=pos_bias)


def reference(x, params, num_heads, seq_length_max=10):
    """Pure-JAX reference matching the PyTorch forward (dropout = identity)."""
    B, S, D = x.shape
    hd = D // num_heads
    scale = hd ** (-0.5)
    q = x @ params["wq"] + params["bq"][0]
    k = x @ params["wk"] + params["bk"][0]
    v = x @ params["wv"] + params["bv"][0]
    q = q.reshape(B, S, num_heads, hd).transpose(0, 2, 1, 3)
    k = k.reshape(B, S, num_heads, hd).transpose(0, 2, 1, 3)
    v = v.reshape(B, S, num_heads, hd).transpose(0, 2, 1, 3)
    scores = jnp.einsum("bhqd,bhkd->bhqk", q, k) * scale
    if S <= seq_length_max:
        rng = jnp.arange(S)
        rel_idx = rng[None, :] - rng[:, None] + S - 1      # PyTorch: + seq_len - 1
        scores = scores + params["pos_bias"][rel_idx][None, None]
    attn = jax.nn.softmax(scores, axis=-1)
    out = jnp.einsum("bhqk,bhkd->bhqd", attn, v)
    out = out.transpose(0, 2, 1, 3).reshape(B, S, D)
    return out @ params["wo"] + params["bo"][0]


if __name__ == "__main__":
    B, S, D, H = 2, 8, 32, 4
    key = jax.random.PRNGKey(0)
    kx, kp = jax.random.split(key)
    x = jax.random.normal(kx, (B, S, D), jnp.float32)
    params = init_params(kp, D)

    out = cross_epoch_attention(x, params, num_heads=H)
    out = jax.block_until_ready(out)

    ref = reference(x, params, num_heads=H)
    np.testing.assert_allclose(np.asarray(out), np.asarray(ref),
                               rtol=2e-3, atol=2e-3)
    print("KERNEL_OK")
</pallas_src>

<mosaic_0001>
module attributes {stable_mosaic.version = 11 : i64} {
  func.func @_attn_kernel(%arg0: i32, %arg1: memref<16x32xf32, #tpu.memory_space<vmem>>, %arg2: memref<32x96xf32, #tpu.memory_space<vmem>>, %arg3: memref<32x32xf32, #tpu.memory_space<vmem>>, %arg4: memref<1x128xf32, #tpu.memory_space<vmem>>, %arg5: memref<16x16xf32, #tpu.memory_space<vmem>>, %arg6: memref<16x32xf32, #tpu.memory_space<vmem>>, %arg7: memref<16x32xf32, #tpu.memory_space<vmem>>) attributes {dimension_semantics = [#tpu.dimension_semantics<parallel>], iteration_bounds = array<i64: 1>, scalar_prefetch = 0 : i64, scratch_operands = 1 : i64, tpu.core_type = #tpu.core_type<tc>, window_params = [{transform_indices = @transform_0, window_bounds = array<i64: 16, 32>}, {pipeline_mode = #tpu.pipeline_mode<synchronous>, transform_indices = @transform_1, window_bounds = array<i64: 32, 96>}, {pipeline_mode = #tpu.pipeline_mode<synchronous>, transform_indices = @transform_2, window_bounds = array<i64: 32, 32>}, {pipeline_mode = #tpu.pipeline_mode<synchronous>, transform_indices = @transform_3, window_bounds = array<i64: 1, 128>}, {pipeline_mode = #tpu.pipeline_mode<synchronous>, transform_indices = @transform_4, window_bounds = array<i64: 16, 16>}, {transform_indices = @transform_5, window_bounds = array<i64: 16, 32>}]} {
    %c0 = arith.constant 0 : index
    %c0_0 = arith.constant 0 : index
    %0 = vector.load %arg1[%c0, %c0_0] : memref<16x32xf32, #tpu.memory_space<vmem>>, vector<16x32xf32>
    %c0_1 = arith.constant 0 : index
    %c0_2 = arith.constant 0 : index
    %1 = vector.load %arg2[%c0_1, %c0_2] : memref<32x96xf32, #tpu.memory_space<vmem>>, vector<32x96xf32>
    %cst = arith.constant dense<0.000000e+00> : vector<16x96xf32>
    %2 = tpu.matmul %0, %1, %cst {dimension_numbers = #tpu.dot_dimension_numbers<[1], [0], [0], [1], [0, 0, 1, 1], [], []>} : vector<16x32xf32>, vector<32x96xf32>, vector<16x96xf32> -> vector<16x96xf32>
    %c0_3 = arith.constant 0 : index
    %c0_4 = arith.constant 0 : index
    %3 = vector.load %arg4[%c0_3, %c0_4] : memref<1x128xf32, #tpu.memory_space<vmem>>, vector<1x96xf32>
    %4 = vector.broadcast %3 : vector<1x96xf32> to vector<16x96xf32>
    %5 = arith.addf %2, %4 : vector<16x96xf32>
    %6 = vector.extract_strided_slice %5 {offsets = [0, 0], sizes = [16, 32], strides = [1, 1]} : vector<16x96xf32> to vector<16x32xf32>
    %cst_5 = arith.constant 0.353553385 : f32
    %7 = vector.broadcast %cst_5 : f32 to vector<16x32xf32>
    %8 = arith.mulf %6, %7 : vector<16x32xf32>
    %9 = vector.extract_strided_slice %5 {offsets = [0, 32], sizes = [16, 32], strides = [1, 1]} : vector<16x96xf32> to vector<16x32xf32>
    %10 = vector.extract_strided_slice %5 {offsets = [0, 64], sizes = [16, 32], strides = [1, 1]} : vector<16x96xf32> to vector<16x32xf32>
    %c0_6 = arith.constant 0 : index
    %c0_7 = arith.constant 0 : index
    %11 = vector.load %arg5[%c0_6, %c0_7] : memref<16x16xf32, #tpu.memory_space<vmem>>, vector<16x16xf32>
    %12 = vector.extract_strided_slice %8 {offsets = [0, 0], sizes = [16, 8], strides = [1, 1]} : vector<16x32xf32> to vector<16x8xf32>
    %13 = vector.extract_strided_slice %9 {offsets = [0, 0], sizes = [16, 8], strides = [1, 1]} : vector<16x32xf32> to vector<16x8xf32>
    %14 = vector.extract_strided_slice %10 {offsets = [0, 0], sizes = [16, 8], strides = [1, 1]} : vector<16x32xf32> to vector<16x8xf32>
    %cst_8 = arith.constant dense<0.000000e+00> : vector<16x16xf32>
    %15 = tpu.matmul %12, %13, %cst_8 {dimension_numbers = #tpu.dot_dimension_numbers<[1], [1], [0], [0], [0, 0, 1, 0], [], []>} : vector<16x8xf32>, vector<16x8xf32>, vector<16x16xf32> -> vector<16x16xf32>
    %16 = arith.addf %15, %11 : vector<16x16xf32>
    %cst_9 = arith.constant dense<0xFF800000> : vector<16xf32>
    %17 = vector.multi_reduction <maximumf>, %16, %cst_9 [1] : vector<16x16xf32> to vector<16xf32>
    %18 = vector.shape_cast %17 : vector<16xf32> to vector<16x1xf32>
    %19 = vector.broadcast %18 : vector<16x1xf32> to vector<16x16xf32>
    %20 = arith.subf %16, %19 : vector<16x16xf32>
    %21 = math.exp %20 : vector<16x16xf32>
    %cst_10 = arith.constant dense<0.000000e+00> : vector<16xf32>
    %22 = vector.multi_reduction <add>, %21, %cst_10 [1] : vector<16x16xf32> to vector<16xf32>
    %23 = vector.shape_cast %22 : vector<16xf32> to vector<16x1xf32>
    %24 = vector.broadcast %23 : vector<16x1xf32> to vector<16x16xf32>
    %25 = arith.divf %21, %24 : vector<16x16xf32>
    %cst_11 = arith.constant dense<0.000000e+00> : vector<16x8xf32>
    %26 = tpu.matmul %25, %14, %cst_11 {dimension_numbers = #tpu.dot_dimension_numbers<[1], [0], [0], [1], [0, 0, 1, 1], [], []>} : vector<16x16xf32>, vector<16x8xf32>, vector<16x8xf32> -> vector<16x8xf32>
    %c0_12 = arith.constant 0 : index
    %c0_13 = arith.constant 0 : index
    %27 = vector.load %arg7[%c0_12, %c0_13] : memref<16x32xf32, #tpu.memory_space<vmem>>, vector<16x8xf32>
    tpu.vector_store %arg7[%c0_12, %c0_13], %26 {strides = array<i32>} : memref<16x32xf32, #tpu.memory_space<vmem>>, vector<16x8xf32>,
    %28 = vector.extract_strided_slice %8 {offsets = [0, 8], sizes = [16, 8], strides = [1, 1]} : vector<16x32xf32> to vector<16x8xf32>
    %29 = vector.extract_strided_slice %9 {offsets = [0, 8], sizes = [16, 8], strides = [1, 1]} : vector<16x32xf32> to vector<16x8xf32>
    %30 = vector.extract_strided_slice %10 {offsets = [0, 8], sizes = [16, 8], strides = [1, 1]} : vector<16x32xf32> to vector<16x8xf32>
    %cst_14 = arith.constant dense<0.000000e+00> : vector<16x16xf32>
    %31 = tpu.matmul %28, %29, %cst_14 {dimension_numbers = #tpu.dot_dimension_numbers<[1], [1], [0], [0], [0, 0, 1, 0], [], []>} : vector<16x8xf32>, vector<16x8xf32>, vector<16x16xf32> -> vector<16x16xf32>
    %32 = arith.addf %31, %11 : vector<16x16xf32>
    %cst_15 = arith.constant dense<0xFF800000> : vector<16xf32>
    %33 = vector.multi_reduction <maximumf>, %32, %cst_15 [1] : vector<16x16xf32> to vector<16xf32>
    %34 = vector.shape_cast %33 : vector<16xf32> to vector<16x1xf32>
    %35 = vector.broadcast %34 : vector<16x1xf32> to vector<16x16xf32>
    %36 = arith.subf %32, %35 : vector<16x16xf32>
    %37 = math.exp %36 : vector<16x16xf32>
    %cst_16 = arith.constant dense<0.000000e+00> : vector<16xf32>
    %38 = vector.multi_reduction <add>, %37, %cst_16 [1] : vector<16x16xf32> to vector<16xf32>
    %39 = vector.shape_cast %38 : vector<16xf32> to vector<16x1xf32>
    %40 = vector.broadcast %39 : vector<16x1xf32> to vector<16x16xf32>
    %41 = arith.divf %37, %40 : vector<16x16xf32>
    %cst_17 = arith.constant dense<0.000000e+00> : vector<16x8xf32>
    %42 = tpu.matmul %41, %30, %cst_17 {dimension_numbers = #tpu.dot_dimension_numbers<[1], [0], [0], [1], [0, 0, 1, 1], [], []>} : vector<16x16xf32>, vector<16x8xf32>, vector<16x8xf32> -> vector<16x8xf32>
    %c0_18 = arith.constant 0 : index
    %c8 = arith.constant 8 : index
    %43 = vector.load %arg7[%c0_18, %c8] : memref<16x32xf32, #tpu.memory_space<vmem>>, vector<16x8xf32>
    tpu.vector_store %arg7[%c0_18, %c8], %42 {strides = array<i32>} : memref<16x32xf32, #tpu.memory_space<vmem>>, vector<16x8xf32>,
    %44 = vector.extract_strided_slice %8 {offsets = [0, 16], sizes = [16, 8], strides = [1, 1]} : vector<16x32xf32> to vector<16x8xf32>
    %45 = vector.extract_strided_slice %9 {offsets = [0, 16], sizes = [16, 8], strides = [1, 1]} : vector<16x32xf32> to vector<16x8xf32>
    %46 = vector.extract_strided_slice %10 {offsets = [0, 16], sizes = [16, 8], strides = [1, 1]} : vector<16x32xf32> to vector<16x8xf32>
    %cst_19 = arith.constant dense<0.000000e+00> : vector<16x16xf32>
    %47 = tpu.matmul %44, %45, %cst_19 {dimension_numbers = #tpu.dot_dimension_numbers<[1], [1], [0], [0], [0, 0, 1, 0], [], []>} : vector<16x8xf32>, vector<16x8xf32>, vector<16x16xf32> -> vector<16x16xf32>
    %48 = arith.addf %47, %11 : vector<16x16xf32>
    %cst_20 = arith.constant dense<0xFF800000> : vector<16xf32>
    %49 = vector.multi_reduction <maximumf>, %48, %cst_20 [1] : vector<16x16xf32> to vector<16xf32>
    %50 = vector.shape_cast %49 : vector<16xf32> to vector<16x1xf32>
    %51 = vector.broadcast %50 : vector<16x1xf32> to vector<16x16xf32>
    %52 = arith.subf %48, %51 : vector<16x16xf32>
    %53 = math.exp %52 : vector<16x16xf32>
    %cst_21 = arith.constant dense<0.000000e+00> : vector<16xf32>
    %54 = vector.multi_reduction <add>, %53, %cst_21 [1] : vector<16x16xf32> to vector<16xf32>
    %55 = vector.shape_cast %54 : vector<16xf32> to vector<16x1xf32>
    %56 = vector.broadcast %55 : vector<16x1xf32> to vector<16x16xf32>
    %57 = arith.divf %53, %56 : vector<16x16xf32>
    %cst_22 = arith.constant dense<0.000000e+00> : vector<16x8xf32>
    %58 = tpu.matmul %57, %46, %cst_22 {dimension_numbers = #tpu.dot_dimension_numbers<[1], [0], [0], [1], [0, 0, 1, 1], [], []>} : vector<16x16xf32>, vector<16x8xf32>, vector<16x8xf32> -> vector<16x8xf32>
    %c0_23 = arith.constant 0 : index
    %c16 = arith.constant 16 : index
    %59 = vector.load %arg7[%c0_23, %c16] : memref<16x32xf32, #tpu.memory_space<vmem>>, vector<16x8xf32>
    tpu.vector_store %arg7[%c0_23, %c16], %58 {strides = array<i32>} : memref<16x32xf32, #tpu.memory_space<vmem>>, vector<16x8xf32>,
    %60 = vector.extract_strided_slice %8 {offsets = [0, 24], sizes = [16, 8], strides = [1, 1]} : vector<16x32xf32> to vector<16x8xf32>
    %61 = vector.extract_strided_slice %9 {offsets = [0, 24], sizes = [16, 8], strides = [1, 1]} : vector<16x32xf32> to vector<16x8xf32>
    %62 = vector.extract_strided_slice %10 {offsets = [0, 24], sizes = [16, 8], strides = [1, 1]} : vector<16x32xf32> to vector<16x8xf32>
    %cst_24 = arith.constant dense<0.000000e+00> : vector<16x16xf32>
    %63 = tpu.matmul %60, %61, %cst_24 {dimension_numbers = #tpu.dot_dimension_numbers<[1], [1], [0], [0], [0, 0, 1, 0], [], []>} : vector<16x8xf32>, vector<16x8xf32>, vector<16x16xf32> -> vector<16x16xf32>
    %64 = arith.addf %63, %11 : vector<16x16xf32>
    %cst_25 = arith.constant dense<0xFF800000> : vector<16xf32>
    %65 = vector.multi_reduction <maximumf>, %64, %cst_25 [1] : vector<16x16xf32> to vector<16xf32>
    %66 = vector.shape_cast %65 : vector<16xf32> to vector<16x1xf32>
    %67 = vector.broadcast %66 : vector<16x1xf32> to vector<16x16xf32>
    %68 = arith.subf %64, %67 : vector<16x16xf32>
    %69 = math.exp %68 : vector<16x16xf32>
    %cst_26 = arith.constant dense<0.000000e+00> : vector<16xf32>
    %70 = vector.multi_reduction <add>, %69, %cst_26 [1] : vector<16x16xf32> to vector<16xf32>
    %71 = vector.shape_cast %70 : vector<16xf32> to vector<16x1xf32>
    %72 = vector.broadcast %71 : vector<16x1xf32> to vector<16x16xf32>
    %73 = arith.divf %69, %72 : vector<16x16xf32>
    %cst_27 = arith.constant dense<0.000000e+00> : vector<16x8xf32>
    %74 = tpu.matmul %73, %62, %cst_27 {dimension_numbers = #tpu.dot_dimension_numbers<[1], [0], [0], [1], [0, 0, 1, 1], [], []>} : vector<16x16xf32>, vector<16x8xf32>, vector<16x8xf32> -> vector<16x8xf32>
    %c0_28 = arith.constant 0 : index
    %c24 = arith.constant 24 : index
    %75 = vector.load %arg7[%c0_28, %c24] : memref<16x32xf32, #tpu.memory_space<vmem>>, vector<16x8xf32>
    tpu.vector_store %arg7[%c0_28, %c24], %74 {strides = array<i32>} : memref<16x32xf32, #tpu.memory_space<vmem>>, vector<16x8xf32>,
    %c0_29 = arith.constant 0 : index
    %c0_30 = arith.constant 0 : index
    %76 = vector.load %arg7[%c0_29, %c0_30] : memref<16x32xf32, #tpu.memory_space<vmem>>, vector<16x32xf32>
    %c0_31 = arith.constant 0 : index
    %c0_32 = arith.constant 0 : index
    %77 = vector.load %arg3[%c0_31, %c0_32] : memref<32x32xf32, #tpu.memory_space<vmem>>, vector<32x32xf32>
    %cst_33 = arith.constant dense<0.000000e+00> : vector<16x32xf32>
    %78 = tpu.matmul %76, %77, %cst_33 {dimension_numbers = #tpu.dot_dimension_numbers<[1], [0], [0], [1], [0, 0, 1, 1], [], []>} : vector<16x32xf32>, vector<32x32xf32>, vector<16x32xf32> -> vector<16x32xf32>
    %c0_34 = arith.constant 0 : index
    %c96 = arith.constant 96 : index
    %79 = vector.load %arg4[%c0_34, %c96] : memref<1x128xf32, #tpu.memory_space<vmem>>, vector<1x32xf32>
    %80 = vector.broadcast %79 : vector<1x32xf32> to vector<16x32xf32>
    %81 = arith.addf %78, %80 : vector<16x32xf32>
    %c0_35 = arith.constant 0 : index
    %c0_36 = arith.constant 0 : index
    %82 = vector.load %arg6[%c0_35, %c0_36] : memref<16x32xf32, #tpu.memory_space<vmem>>, vector<16x32xf32>
    tpu.vector_store %arg6[%c0_35, %c0_36], %81 {strides = array<i32>} : memref<16x32xf32, #tpu.memory_space<vmem>>, vector<16x32xf32>,
    return
  }
  func.func @transform_0(%arg0: i32) -> (i32, i32) {
    %c0_i32 = arith.constant 0 : i32
    %c0_i32_0 = arith.constant 0 : i32
    return %arg0, %c0_i32 : i32, i32
  }
  func.func @transform_1(%arg0: i32) -> (i32, i32) {
    %c0_i32 = arith.constant 0 : i32
    %c0_i32_0 = arith.constant 0 : i32
    %c0_i32_1 = arith.constant 0 : i32
    return %c0_i32, %c0_i32_0 : i32, i32
  }
  func.func @transform_2(%arg0: i32) -> (i32, i32) {
    %c0_i32 = arith.constant 0 : i32
    %c0_i32_0 = arith.constant 0 : i32
    %c0_i32_1 = arith.constant 0 : i32
    return %c0_i32, %c0_i32_0 : i32, i32
  }
  func.func @transform_3(%arg0: i32) -> (i32, i32) {
    %c0_i32 = arith.constant 0 : i32
    %c0_i32_0 = arith.constant 0 : i32
    %c0_i32_1 = arith.constant 0 : i32
    return %c0_i32, %c0_i32_0 : i32, i32
  }
  func.func @transform_4(%arg0: i32) -> (i32, i32) {
    %c0_i32 = arith.constant 0 : i32
    %c0_i32_0 = arith.constant 0 : i32
    %c0_i32_1 = arith.constant 0 : i32
    return %c0_i32, %c0_i32_0 : i32, i32
  }
  func.func @transform_5(%arg0: i32) -> (i32, i32) {
    %c0_i32 = arith.constant 0 : i32
    %c0_i32_0 = arith.constant 0 : i32
    return %arg0, %c0_i32 : i32, i32
  }
}

</mosaic_0001>

<llo_original>
// kernel: tpu_custom_call.1
$region0: #{tpu_custom_call.1}
  #allocation0 [shape = 'u32[]', space=smem, size = 0x4, offset = 0x4, fixed_abs, tag = 'smem constant byte address 0x4 - core index']
  #allocation1 [shape = 'u32[72,128]{1,0:T(1,128)}', space=vmem, size = 0x9000, scoped, tag = 'internal scratch']
  #allocation2 [shape = 'f32[16,32]{1,0:T(8,128)}', space=vmem, size = 0x2000, scoped, tag = 'scratch operand']
  %s0 = inlined_call_operand.hbm [shape: f32[16,32], index: 0, kind: input, shape index: {}]
  %s1 = inlined_call_operand.hbm [shape: f32[32,96], index: 1, kind: input, shape index: {}]
  %s2 = inlined_call_operand.hbm [shape: f32[32,32], index: 2, kind: input, shape index: {}]
  %s3 = inlined_call_operand.vmem [shape: f32[1,128], index: 3, kind: input, shape index: {}]
  %s4 = inlined_call_operand.hbm [shape: f32[16,16], index: 4, kind: input, shape index: {}]
  %s5 = inlined_call_operand.hbm [shape: f32[16,32], index: 5, kind: output, shape index: {}]
  %s6 = sld [smem:[#allocation0]]
  $region46: #{tpu_custom_call.1} parent=0
    _
  %s8 = ssub.s32 1, %s6
  %s9 = scalar_select 0, %s8, %s6
  $region1: #{tpu_custom_call.1} parent=0
    #allocation3 [shape = 'u8[8192]{0}', space=vmem, size = 0x2000, scoped, tag = 'input window, operand 0, single buffered']
    #allocation4 [shape = 's32[1]{0}', space=sflag, size = 0x4, scoped, tag = 'scoped memory for tpu_custom_call.1']
    #allocation5 [shape = 's32[1]{0}', space=sflag, size = 0x4, scoped, tag = 'scoped memory for tpu_custom_call.1']
    #allocation6 [shape = 'u8[16384]{0}', space=vmem, size = 0x4000, scoped, tag = 'input window, operand 1, single buffered']
    #allocation7 [shape = 's32[1]{0}', space=sflag, size = 0x4, scoped, tag = 'scoped memory for tpu_custom_call.1']
    #allocation8 [shape = 'u8[16384]{0}', space=vmem, size = 0x4000, scoped, tag = 'input window, operand 2, single buffered']
    #allocation9 [shape = 'u8[8192]{0}', space=vmem, size = 0x2000, scoped, tag = 'input window, operand 4, single buffered']
    #allocation10 [shape = 's32[1]{0}', space=sflag, size = 0x4, scoped, tag = 'scoped memory for tpu_custom_call.1']
    #allocation11 [shape = 'u8[8192]{0}', space=vmem, size = 0x2000, scoped, tag = 'output window, operand 0, single buffered']
    %10 = vsyncpa [#allocation4], 0
    %11 = vsyncpa [#allocation7], 0
    %12 = vsyncpa [#allocation10], 0
    %13 = vsyncpa [#allocation5], 0
    // Predicated region
    $region2: #{tpu_custom_call.1} parent=1 // pred_check
      _
    $region3: #{tpu_custom_call.1} parent=1 // pred_check_branch
      %15 = sbr.rel (0) target = $region5
    $region4: #{tpu_custom_call.1} parent=1 // pred_region
      %17 = vsyncadd [#allocation4], 0
      %s18 = sshll.u32 %s0, 4
      %s19 = int_to_ptr.hbm [resolvable:$true] %s18
      %s20 = sshll.u32 [#allocation3], 4
      %s21 = int_to_ptr.vmem [resolvable:$true] %s20
      %26 = dma.hbm_to_vmem [thread:$0]  %s19, 256, %s21, [#allocation4], 128, 128, 8
    $region5: #{tpu_custom_call.1} parent=1 // pred_fallthru
      _
    // Predicated region
    $region6: #{tpu_custom_call.1} parent=1 // pred_check
      _
    $region7: #{tpu_custom_call.1} parent=1 // pred_check_branch
      %28 = sbr.rel (0) target = $region9
    $region8: #{tpu_custom_call.1} parent=1 // pred_region
      %30 = vsyncadd [#allocation7], 0
      %s31 = sshll.u32 %s1, 4
      %s32 = int_to_ptr.hbm [resolvable:$true] %s31
      %s33 = sshll.u32 [#allocation6], 4
      %s34 = int_to_ptr.vmem [resolvable:$true] %s33
      %39 = dma.hbm_to_vmem [thread:$0]  %s32, 512, %s34, [#allocation7], 128, 128, 8
    $region9: #{tpu_custom_call.1} parent=1 // pred_fallthru
      _
    // Predicated region
    $region10: #{tpu_custom_call.1} parent=1 // pred_check
      _
    $region11: #{tpu_custom_call.1} parent=1 // pred_check_branch
      %41 = sbr.rel (0) target = $region13
    $region12: #{tpu_custom_call.1} parent=1 // pred_region
      %43 = vsyncadd [#allocation7], 0
      %s44 = sshll.u32 %s2, 4
      %s45 = int_to_ptr.hbm [resolvable:$true] %s44
      %s46 = sshll.u32 [#allocation8], 4
      %s47 = int_to_ptr.vmem [resolvable:$true] %s46
      %52 = dma.hbm_to_vmem [thread:$0]  %s45, 512, %s47, [#allocation7], 128, 128, 8
    $region13: #{tpu_custom_call.1} parent=1 // pred_fallthru
      _
    // Predicated region
    $region14: #{tpu_custom_call.1} parent=1 // pred_check
      _
    $region15: #{tpu_custom_call.1} parent=1 // pred_check_branch
      %54 = sbr.rel (0) target = $region17
    $region16: #{tpu_custom_call.1} parent=1 // pred_region
      _
    $region17: #{tpu_custom_call.1} parent=1 // pred_fallthru
      _
    // Predicated region
    $region18: #{tpu_custom_call.1} parent=1 // pred_check
      _
    $region19: #{tpu_custom_call.1} parent=1 // pred_check_branch
      %56 = sbr.rel (0) target = $region21
    $region20: #{tpu_custom_call.1} parent=1 // pred_region
      %58 = vsyncadd [#allocation10], 0
      %s59 = sshll.u32 %s4, 4
      %s60 = int_to_ptr.hbm [resolvable:$true] %s59
      %s61 = sshll.u32 [#allocation9], 4
      %s62 = int_to_ptr.vmem [resolvable:$true] %s61
      %67 = dma.hbm_to_vmem [thread:$0]  %s60, 256, %s62, [#allocation10], 128, 128, 8
    $region21: #{tpu_custom_call.1} parent=1 // pred_fallthru
      _
    // Predicated region
    $region22: #{tpu_custom_call.1} parent=1 // pred_check
      _
    $region23: #{tpu_custom_call.1} parent=1 // pred_check_branch
      %69 = sbr.rel (0) target = $region25
    $region24: #{tpu_custom_call.1} parent=1 // pred_region
      %71 = dma.done [#allocation4], 256
    $region25: #{tpu_custom_call.1} parent=1 // pred_fallthru
      _
    // Predicated region
    $region26: #{tpu_custom_call.1} parent=1 // pred_check
      _
    $region27: #{tpu_custom_call.1} parent=1 // pred_check_branch
      %73 = sbr.rel (0) target = $region29
    $region28: #{tpu_custom_call.1} parent=1 // pred_region
      %75 = dma.done [#allocation7], 512
    $region29: #{tpu_custom_call.1} parent=1 // pred_fallthru
      _
    // Predicated region
    $region30: #{tpu_custom_call.1} parent=1 // pred_check
      _
    $region31: #{tpu_custom_call.1} parent=1 // pred_check_branch
      %77 = sbr.rel (0) target = $region33
    $region32: #{tpu_custom_call.1} parent=1 // pred_region
      %79 = dma.done [#allocation7], 512
    $region33: #{tpu_custom_call.1} parent=1 // pred_fallthru
      _
    // Predicated region
    $region34: #{tpu_custom_call.1} parent=1 // pred_check
      _
    $region35: #{tpu_custom_call.1} parent=1 // pred_check_branch
      %81 = sbr.rel (0) target = $region37
    $region36: #{tpu_custom_call.1} parent=1 // pred_region
      %83 = dma.done [#allocation10], 256
    $region37: #{tpu_custom_call.1} parent=1 // pred_fallthru
      _
    %v84 = vld [vmem:[#allocation3] sm:$0xff]
    %v85 = vld [vmem:[#allocation3 + $0x8] sm:$0xff]
    %v86 = vld [vmem:[#allocation6] sm:$0xff]
    %v87 = vld [vmem:[#allocation6 + $0x8] sm:$0xff]
    %v88 = vld [vmem:[#allocation6 + $0x10] sm:$0xff]
    %v89 = vld [vmem:[#allocation6 + $0x18] sm:$0xff]
    %v90 = vld [vmem:[%s3] sm:$0x1]
    %v92 = vperm.slane %v90, 0
    %vm94 = vcmask 261120
    %v96 = vsel %vm94, %v84, 0
    %v99 = vsel %vm94, %v85, 0
    %101 = vmatpush.msra.mxu0 0.0
    %102 = vmatpush.msra.mxu0 0.0
    %103 = vmatpush.msra.mxu0 0.0
    %104 = vmatpush.msra.mxu0 0.0
    %105 = vmatpush.msra.mxu0 0.0
    %106 = vmatpush.msra.mxu0 0.0
    %107 = vmatpush.msra.mxu0 0.0
    %108 = vmatpush.msra.mxu0 0.0
    %109 = vmatpush.msra.mxu0 0.0
    %110 = vmatpush.msra.mxu0 0.0
    %111 = vmatpush.msra.mxu0 0.0
    %112 = vmatpush.msra.mxu0 0.0
    %113 = vmatpush.msra.mxu0 %v89
    %114 = vmatpush.msra.mxu0 %v88
    %115 = vmatpush.msra.mxu0 %v87
    %116 = vmatpush.msra.mxu0 %v86
    %117 = vmatmul.f32.gmra.mxu0 %v96
    %v118 = vpop.f32.mrf.mxu0
    %v119 = vadd.f32 %v92, %v118
    %120 = vmatmul.f32.gmra.mxu0 %v99
    %v121 = vpop.f32.mrf.mxu0
    %v122 = vadd.f32 %v92, %v121
    %123 = vdwg.mxu0
    %v124 = vmul.f32 %v119, 0.35355338
    %v125 = vmul.f32 %v122, 0.35355338
    %v126 = vld [vmem:[#allocation9] sm:$0xff]
    %v127 = vld [vmem:[#allocation9 + $0x8] sm:$0xff]
    %130 = vrot.lane.b32.xlu0 %v119, 96
    %v131 = vpop.permute.xlu0 %130
    %132 = vrot.lane.b32.xlu0 %v122, 96
    %v133 = vpop.permute.xlu0 %132
    %vm134 = vcmask 64512
    %v136 = vsel %vm134, %v124, 0
    %v139 = vsel %vm134, %v125, 0
    %v141 = vsel %vm134, %v131, 0
    %v143 = vsel %vm134, %v133, 0
    %145 = vmatpush.xpose.msra.mxu0 0.0
    %146 = vmatpush.xpose.msra.mxu0 0.0
    %147 = vmatpush.xpose.msra.mxu0 0.0
    %148 = vmatpush.xpose.msra.mxu0 0.0
    %149 = vmatpush.xpose.msra.mxu0 0.0
    %150 = vmatpush.xpose.msra.mxu0 0.0
    %151 = vmatpush.xpose.msra.mxu0 0.0
    %152 = vmatpush.xpose.msra.mxu0 0.0
    %153 = vmatpush.xpose.msra.mxu0 0.0
    %154 = vmatpush.xpose.msra.mxu0 0.0
    %155 = vmatpush.xpose.msra.mxu0 0.0
    %156 = vmatpush.xpose.msra.mxu0 0.0
    %157 = vmatpush.xpose.msra.mxu0 0.0
    %158 = vmatpush.xpose.msra.mxu0 0.0
    %159 = vmatpush.xpose.msra.mxu0 %v143
    %160 = vmatpush.xpose.msra.mxu0 %v141
    %161 = vmatmul.f32.gmra.mxu0 %v136
    %v162 = vpop.f32.mrf.mxu0
    %v163 = vadd.f32 %v126, %v162
    %164 = vmatmul.f32.gmra.mxu0 %v139
    %v165 = vpop.f32.mrf.mxu0
    %v166 = vadd.f32 %v127, %v165
    %167 = vdwg.mxu0
    %vm168 = vcmask 130048
    %v169 = vsel %vm168, %v163, -inf
    %170 = vmax.xlane.f32.xlu0 %v169
    %v171 = vpop.xlane.xlu0 %170
    %v172 = vsel %vm168, %v166, -inf
    %173 = vmax.xlane.f32.xlu0 %v172
    %v174 = vpop.xlane.xlu0 %173
    %v175 = vsub.f32 %v163, %v171
    %v176 = vsub.f32 %v166, %v174
    %v177 = vmul.f32 %v175, 1.442695
    %v178 = vpow.pop %v177
    %v179 = vmul.f32 %v176, 1.442695
    %v180 = vpow.pop %v179
    %v181 = vsel %vm168, %v178, 0.0
    %182 = vadd.xlane.f32.xlu0 %v181
    %v183 = vpop.xlane.xlu0 %182
    %v184 = vsel %vm168, %v180, 0.0
    %185 = vadd.xlane.f32.xlu0 %v184
    %v186 = vpop.xlane.xlu0 %185
    %v187 = vrcp.pop %v183
    %v188 = vmul.f32 %v183, %v187
    %v189 = vsub.f32 1.0, %v188
    %v190 = vmul.f32 %v187, %v189
    %v191 = vadd.f32 %v187, %v190
    %vm192 = vweird.f32 %v183
    %vm193 = vweird.f32 %v187
    %vm194 = vmor %vm192, %vm193
    %v195 = vsel %vm194, %v187, %v191
    %v196 = vand.u32 2147483647, %v183
    %vm197 = vcmp.eq.f32.partialorder %v196, 8.507059e+37
    %v198 = vand.u32 %v183, 2147483648
    %v199 = vor.u32 1.1754944e-38, %v198
    %v200 = vsel %vm197, %v199, %v195
    %v201 = vmul.f32 %v178, %v200
    %v202 = vrcp.pop %v186
    %v203 = vmul.f32 %v186, %v202
    %v204 = vsub.f32 1.0, %v203
    %v205 = vmul.f32 %v202, %v204
    %v206 = vadd.f32 %v202, %v205
    %vm207 = vweird.f32 %v186
    %vm208 = vweird.f32 %v202
    %vm209 = vmor %vm207, %vm208
    %v210 = vsel %vm209, %v202, %v206
    %v211 = vand.u32 2147483647, %v186
    %vm212 = vcmp.eq.f32.partialorder %v211, 8.507059e+37
    %v213 = vand.u32 %v186, 2147483648
    %v214 = vor.u32 1.1754944e-38, %v213
    %v215 = vsel %vm212, %v214, %v210
    %v216 = vmul.f32 %v180, %v215
    %217 = vrot.lane.b32.xlu0 %v119, 64
    %v218 = vpop.permute.xlu0 %217
    %219 = vrot.lane.b32.xlu0 %v122, 64
    %v220 = vpop.permute.xlu0 %219
    %v224 = vsel %vm168, %v201, 0
    %v227 = vsel %vm168, %v216, 0
    %229 = vmatpush.msra.mxu0 0.0
    %230 = vmatpush.msra.mxu0 0.0
    %231 = vmatpush.msra.mxu0 0.0
    %232 = vmatpush.msra.mxu0 0.0
    %233 = vmatpush.msra.mxu0 0.0
    %234 = vmatpush.msra.mxu0 0.0
    %235 = vmatpush.msra.mxu0 0.0
    %236 = vmatpush.msra.mxu0 0.0
    %237 = vmatpush.msra.mxu0 0.0
    %238 = vmatpush.msra.mxu0 0.0
    %239 = vmatpush.msra.mxu0 0.0
    %240 = vmatpush.msra.mxu0 0.0
    %241 = vmatpush.msra.mxu0 0.0
    %242 = vmatpush.msra.mxu0 0.0
    %243 = vmatpush.msra.mxu0 %v220
    %244 = vmatpush.msra.mxu0 %v218
    %245 = vmatmul.f32.gmra.mxu0 %v224
    %v246 = vpop.f32.mrf.mxu0
    %v247 = vadd.f32 0.0, %v246
    %248 = vmatmul.f32.gmra.mxu0 %v227
    %v249 = vpop.f32.mrf.mxu0
    %v250 = vadd.f32 0.0, %v249
    %251 = vdwg.mxu0
    %252 = vst.msk [vmem:[#allocation2] sm:$0xff] %vm134, %v247
    %253 = vst.msk [vmem:[#allocation2 + $0x8] sm:$0xff] %vm134, %v250
    %254 = vrot.lane.b32.xlu0 %v124, 120
    %v255 = vpop.permute.xlu0 %254
    %256 = vrot.lane.b32.xlu0 %v125, 120
    %v257 = vpop.permute.xlu0 %256
    %258 = vrot.lane.b32.xlu0 %v119, 88
    %v259 = vpop.permute.xlu0 %258
    %260 = vrot.lane.b32.xlu0 %v122, 88
    %v261 = vpop.permute.xlu0 %260
    %v262 = vsel %vm134, %v255, 0
    %v264 = vsel %vm134, %v257, 0
    %v266 = vsel %vm134, %v259, 0
    %v268 = vsel %vm134, %v261, 0
    %270 = vmatpush.xpose.msra.mxu0 0.0
    %271 = vmatpush.xpose.msra.mxu0 0.0
    %272 = vmatpush.xpose.msra.mxu0 0.0
    %273 = vmatpush.xpose.msra.mxu0 0.0
    %274 = vmatpush.xpose.msra.mxu0 0.0
    %275 = vmatpush.xpose.msra.mxu0 0.0
    %276 = vmatpush.xpose.msra.mxu0 0.0
    %277 = vmatpush.xpose.msra.mxu0 0.0
    %278 = vmatpush.xpose.msra.mxu0 0.0
    %279 = vmatpush.xpose.msra.mxu0 0.0
    %280 = vmatpush.xpose.msra.mxu0 0.0
    %281 = vmatpush.xpose.msra.mxu0 0.0
    %282 = vmatpush.xpose.msra.mxu0 0.0
    %283 = vmatpush.xpose.msra.mxu0 0.0
    %284 = vmatpush.xpose.msra.mxu0 %v268
    %285 = vmatpush.xpose.msra.mxu0 %v266
    %286 = vmatmul.f32.gmra.mxu0 %v262
    %v287 = vpop.f32.mrf.mxu0
    %v288 = vadd.f32 %v126, %v287
    %289 = vmatmul.f32.gmra.mxu0 %v264
    %v290 = vpop.f32.mrf.mxu0
    %v291 = vadd.f32 %v127, %v290
    %292 = vdwg.mxu0
    %v293 = vsel %vm168, %v288, -inf
    %294 = vmax.xlane.f32.xlu0 %v293
    %v295 = vpop.xlane.xlu0 %294
    %v296 = vsel %vm168, %v291, -inf
    %297 = vmax.xlane.f32.xlu0 %v296
    %v298 = vpop.xlane.xlu0 %297
    %v299 = vsub.f32 %v288, %v295
    %v300 = vsub.f32 %v291, %v298
    %v301 = vmul.f32 %v299, 1.442695
    %v302 = vpow.pop %v301
    %v303 = vmul.f32 %v300, 1.442695
    %v304 = vpow.pop %v303
    %v305 = vsel %vm168, %v302, 0.0
    %306 = vadd.xlane.f32.xlu0 %v305
    %v307 = vpop.xlane.xlu0 %306
    %v308 = vsel %vm168, %v304, 0.0
    %309 = vadd.xlane.f32.xlu0 %v308
    %v310 = vpop.xlane.xlu0 %309
    %v311 = vrcp.pop %v307
    %v312 = vmul.f32 %v307, %v311
    %v313 = vsub.f32 1.0, %v312
    %v314 = vmul.f32 %v311, %v313
    %v315 = vadd.f32 %v311, %v314
    %vm316 = vweird.f32 %v307
    %vm317 = vweird.f32 %v311
    %vm318 = vmor %vm316, %vm317
    %v319 = vsel %vm318, %v311, %v315
    %v320 = vand.u32 2147483647, %v307
    %vm321 = vcmp.eq.f32.partialorder %v320, 8.507059e+37
    %v322 = vand.u32 %v307, 2147483648
    %v323 = vor.u32 1.1754944e-38, %v322
    %v324 = vsel %vm321, %v323, %v319
    %v325 = vmul.f32 %v302, %v324
    %v326 = vrcp.pop %v310
    %v327 = vmul.f32 %v310, %v326
    %v328 = vsub.f32 1.0, %v327
    %v329 = vmul.f32 %v326, %v328
    %v330 = vadd.f32 %v326, %v329
    %vm331 = vweird.f32 %v310
    %vm332 = vweird.f32 %v326
    %vm333 = vmor %vm331, %vm332
    %v334 = vsel %vm333, %v326, %v330
    %v335 = vand.u32 2147483647, %v310
    %vm336 = vcmp.eq.f32.partialorder %v335, 8.507059e+37
    %v337 = vand.u32 %v310, 2147483648
    %v338 = vor.u32 1.1754944e-38, %v337
    %v339 = vsel %vm336, %v338, %v334
    %v340 = vmul.f32 %v304, %v339
    %341 = vrot.lane.b32.xlu0 %v119, 56
    %v342 = vpop.permute.xlu0 %341
    %343 = vrot.lane.b32.xlu0 %v122, 56
    %v344 = vpop.permute.xlu0 %343
    %v348 = vsel %vm168, %v325, 0
    %v351 = vsel %vm168, %v340, 0
    %353 = vmatpush.msra.mxu0 0.0
    %354 = vmatpush.msra.mxu0 0.0
    %355 = vmatpush.msra.mxu0 0.0
    %356 = vmatpush.msra.mxu0 0.0
    %357 = vmatpush.msra.mxu0 0.0
    %358 = vmatpush.msra.mxu0 0.0
    %359 = vmatpush.msra.mxu0 0.0
    %360 = vmatpush.msra.mxu0 0.0
    %361 = vmatpush.msra.mxu0 0.0
    %362 = vmatpush.msra.mxu0 0.0
    %363 = vmatpush.msra.mxu0 0.0
    %364 = vmatpush.msra.mxu0 0.0
    %365 = vmatpush.msra.mxu0 0.0
    %366 = vmatpush.msra.mxu0 0.0
    %367 = vmatpush.msra.mxu0 %v344
    %368 = vmatpush.msra.mxu0 %v342
    %369 = vmatmul.f32.gmra.mxu0 %v348
    %v370 = vpop.f32.mrf.mxu0
    %v371 = vadd.f32 0.0, %v370
    %372 = vmatmul.f32.gmra.mxu0 %v351
    %v373 = vpop.f32.mrf.mxu0
    %v374 = vadd.f32 0.0, %v373
    %375 = vdwg.mxu0
    %378 = vrot.lane.b32.xlu0 %v371, 8
    %v379 = vpop.permute.xlu0 %378
    %380 = vrot.lane.b32.xlu0 %v374, 8
    %v381 = vpop.permute.xlu0 %380
    %vm384 = vcmask 130112
    %385 = vst.msk [vmem:[#allocation2] sm:$0xff] %vm384, %v379
    %386 = vst.msk [vmem:[#allocation2 + $0x8] sm:$0xff] %vm384, %v381
    %387 = vrot.lane.b32.xlu0 %v124, 112
    %v388 = vpop.permute.xlu0 %387
    %389 = vrot.lane.b32.xlu0 %v125, 112
    %v390 = vpop.permute.xlu0 %389
    %391 = vrot.lane.b32.xlu0 %v119, 80
    %v392 = vpop.permute.xlu0 %391
    %393 = vrot.lane.b32.xlu0 %v122, 80
    %v394 = vpop.permute.xlu0 %393
    %v395 = vsel %vm134, %v388, 0
    %v397 = vsel %vm134, %v390, 0
    %v399 = vsel %vm134, %v392, 0
    %v401 = vsel %vm134, %v394, 0
    %403 = vmatpush.xpose.msra.mxu0 0.0
    %404 = vmatpush.xpose.msra.mxu0 0.0
    %405 = vmatpush.xpose.msra.mxu0 0.0
    %406 = vmatpush.xpose.msra.mxu0 0.0
    %407 = vmatpush.xpose.msra.mxu0 0.0
    %408 = vmatpush.xpose.msra.mxu0 0.0
    %409 = vmatpush.xpose.msra.mxu0 0.0
    %410 = vmatpush.xpose.msra.mxu0 0.0
    %411 = vmatpush.xpose.msra.mxu0 0.0
    %412 = vmatpush.xpose.msra.mxu0 0.0
    %413 = vmatpush.xpose.msra.mxu0 0.0
    %414 = vmatpush.xpose.msra.mxu0 0.0
    %415 = vmatpush.xpose.msra.mxu0 0.0
    %416 = vmatpush.xpose.msra.mxu0 0.0
    %417 = vmatpush.xpose.msra.mxu0 %v401
    %418 = vmatpush.xpose.msra.mxu0 %v399
    %419 = vmatmul.f32.gmra.mxu0 %v395
    %v420 = vpop.f32.mrf.mxu0
    %v421 = vadd.f32 %v126, %v420
    %422 = vmatmul.f32.gmra.mxu0 %v397
    %v423 = vpop.f32.mrf.mxu0
    %v424 = vadd.f32 %v127, %v423
    %425 = vdwg.mxu0
    %v426 = vsel %vm168, %v421, -inf
    %427 = vmax.xlane.f32.xlu0 %v426
    %v428 = vpop.xlane.xlu0 %427
    %v429 = vsel %vm168, %v424, -inf
    %430 = vmax.xlane.f32.xlu0 %v429
    %v431 = vpop.xlane.xlu0 %430
    %v432 = vsub.f32 %v421, %v428
    %v433 = vsub.f32 %v424, %v431
    %v434 = vmul.f32 %v432, 1.442695
    %v435 = vpow.pop %v434
    %v436 = vmul.f32 %v433, 1.442695
    %v437 = vpow.pop %v436
    %v438 = vsel %vm168, %v435, 0.0
    %439 = vadd.xlane.f32.xlu0 %v438
    %v440 = vpop.xlane.xlu0 %439
    %v441 = vsel %vm168, %v437, 0.0
    %442 = vadd.xlane.f32.xlu0 %v441
    %v443 = vpop.xlane.xlu0 %442
    %v444 = vrcp.pop %v440
    %v445 = vmul.f32 %v440, %v444
    %v446 = vsub.f32 1.0, %v445
    %v447 = vmul.f32 %v444, %v446
    %v448 = vadd.f32 %v444, %v447
    %vm449 = vweird.f32 %v440
    %vm450 = vweird.f32 %v444
    %vm451 = vmor %vm449, %vm450
    %v452 = vsel %vm451, %v444, %v448
    %v453 = vand.u32 2147483647, %v440
    %vm454 = vcmp.eq.f32.partialorder %v453, 8.507059e+37
    %v455 = vand.u32 %v440, 2147483648
    %v456 = vor.u32 1.1754944e-38, %v455
    %v457 = vsel %vm454, %v456, %v452
    %v458 = vmul.f32 %v435, %v457
    %v459 = vrcp.pop %v443
    %v460 = vmul.f32 %v443, %v459
    %v461 = vsub.f32 1.0, %v460
    %v462 = vmul.f32 %v459, %v461
    %v463 = vadd.f32 %v459, %v462
    %vm464 = vweird.f32 %v443
    %vm465 = vweird.f32 %v459
    %vm466 = vmor %vm464, %vm465
    %v467 = vsel %vm466, %v459, %v463
    %v468 = vand.u32 2147483647, %v443
    %vm469 = vcmp.eq.f32.partialorder %v468, 8.507059e+37
    %v470 = vand.u32 %v443, 2147483648
    %v471 = vor.u32 1.1754944e-38, %v470
    %v472 = vsel %vm469, %v471, %v467
    %v473 = vmul.f32 %v437, %v472
    %474 = vrot.lane.b32.xlu0 %v119, 48
    %v475 = vpop.permute.xlu0 %474
    %476 = vrot.lane.b32.xlu0 %v122, 48
    %v477 = vpop.permute.xlu0 %476
    %v481 = vsel %vm168, %v458, 0
    %v484 = vsel %vm168, %v473, 0
    %486 = vmatpush.msra.mxu0 0.0
    %487 = vmatpush.msra.mxu0 0.0
    %488 = vmatpush.msra.mxu0 0.0
    %489 = vmatpush.msra.mxu0 0.0
    %490 = vmatpush.msra.mxu0 0.0
    %491 = vmatpush.msra.mxu0 0.0
    %492 = vmatpush.msra.mxu0 0.0
    %493 = vmatpush.msra.mxu0 0.0
    %494 = vmatpush.msra.mxu0 0.0
    %495 = vmatpush.msra.mxu0 0.0
    %496 = vmatpush.msra.mxu0 0.0
    %497 = vmatpush.msra.mxu0 0.0
    %498 = vmatpush.msra.mxu0 0.0
    %499 = vmatpush.msra.mxu0 0.0
    %500 = vmatpush.msra.mxu0 %v477
    %501 = vmatpush.msra.mxu0 %v475
    %502 = vmatmul.f32.gmra.mxu0 %v481
    %v503 = vpop.f32.mrf.mxu0
    %v504 = vadd.f32 0.0, %v503
    %505 = vmatmul.f32.gmra.mxu0 %v484
    %v506 = vpop.f32.mrf.mxu0
    %v507 = vadd.f32 0.0, %v506
    %508 = vdwg.mxu0
    %511 = vrot.lane.b32.xlu0 %v504, 16
    %v512 = vpop.permute.xlu0 %511
    %513 = vrot.lane.b32.xlu0 %v507, 16
    %v514 = vpop.permute.xlu0 %513
    %vm517 = vcmask 195712
    %518 = vst.msk [vmem:[#allocation2] sm:$0xff] %vm517, %v512
    %519 = vst.msk [vmem:[#allocation2 + $0x8] sm:$0xff] %vm517, %v514
    %520 = vrot.lane.b32.xlu0 %v124, 104
    %v521 = vpop.permute.xlu0 %520
    %522 = vrot.lane.b32.xlu0 %v125, 104
    %v523 = vpop.permute.xlu0 %522
    %524 = vrot.lane.b32.xlu0 %v119, 72
    %v525 = vpop.permute.xlu0 %524
    %526 = vrot.lane.b32.xlu0 %v122, 72
    %v527 = vpop.permute.xlu0 %526
    %v528 = vsel %vm134, %v521, 0
    %v530 = vsel %vm134, %v523, 0
    %v532 = vsel %vm134, %v525, 0
    %v534 = vsel %vm134, %v527, 0
    %536 = vmatpush.xpose.msra.mxu0 0.0
    %537 = vmatpush.xpose.msra.mxu0 0.0
    %538 = vmatpush.xpose.msra.mxu0 0.0
    %539 = vmatpush.xpose.msra.mxu0 0.0
    %540 = vmatpush.xpose.msra.mxu0 0.0
    %541 = vmatpush.xpose.msra.mxu0 0.0
    %542 = vmatpush.xpose.msra.mxu0 0.0
    %543 = vmatpush.xpose.msra.mxu0 0.0
    %544 = vmatpush.xpose.msra.mxu0 0.0
    %545 = vmatpush.xpose.msra.mxu0 0.0
    %546 = vmatpush.xpose.msra.mxu0 0.0
    %547 = vmatpush.xpose.msra.mxu0 0.0
    %548 = vmatpush.xpose.msra.mxu0 0.0
    %549 = vmatpush.xpose.msra.mxu0 0.0
    %550 = vmatpush.xpose.msra.mxu0 %v534
    %551 = vmatpush.xpose.msra.mxu0 %v532
    %552 = vmatmul.f32.gmra.mxu0 %v528
    %v553 = vpop.f32.mrf.mxu0
    %v554 = vadd.f32 %v126, %v553
    %555 = vmatmul.f32.gmra.mxu0 %v530
    %v556 = vpop.f32.mrf.mxu0
    %v557 = vadd.f32 %v127, %v556
    %558 = vdwg.mxu0
    %v559 = vsel %vm168, %v554, -inf
    %560 = vmax.xlane.f32.xlu0 %v559
    %v561 = vpop.xlane.xlu0 %560
    %v562 = vsel %vm168, %v557, -inf
    %563 = vmax.xlane.f32.xlu0 %v562
    %v564 = vpop.xlane.xlu0 %563
    %v565 = vsub.f32 %v554, %v561
    %v566 = vsub.f32 %v557, %v564
    %v567 = vmul.f32 %v565, 1.442695
    %v568 = vpow.pop %v567
    %v569 = vmul.f32 %v566, 1.442695
    %v570 = vpow.pop %v569
    %v571 = vsel %vm168, %v568, 0.0
    %572 = vadd.xlane.f32.xlu0 %v571
    %v573 = vpop.xlane.xlu0 %572
    %v574 = vsel %vm168, %v570, 0.0
    %575 = vadd.xlane.f32.xlu0 %v574
    %v576 = vpop.xlane.xlu0 %575
    %v577 = vrcp.pop %v573
    %v578 = vmul.f32 %v573, %v577
    %v579 = vsub.f32 1.0, %v578
    %v580 = vmul.f32 %v577, %v579
    %v581 = vadd.f32 %v577, %v580
    %vm582 = vweird.f32 %v573
    %vm583 = vweird.f32 %v577
    %vm584 = vmor %vm582, %vm583
    %v585 = vsel %vm584, %v577, %v581
    %v586 = vand.u32 2147483647, %v573
    %vm587 = vcmp.eq.f32.partialorder %v586, 8.507059e+37
    %v588 = vand.u32 %v573, 2147483648
    %v589 = vor.u32 1.1754944e-38, %v588
    %v590 = vsel %vm587, %v589, %v585
    %v591 = vmul.f32 %v568, %v590
    %v592 = vrcp.pop %v576
    %v593 = vmul.f32 %v576, %v592
    %v594 = vsub.f32 1.0, %v593
    %v595 = vmul.f32 %v592, %v594
    %v596 = vadd.f32 %v592, %v595
    %vm597 = vweird.f32 %v576
    %vm598 = vweird.f32 %v592
    %vm599 = vmor %vm597, %vm598
    %v600 = vsel %vm599, %v592, %v596
    %v601 = vand.u32 2147483647, %v576
    %vm602 = vcmp.eq.f32.partialorder %v601, 8.507059e+37
    %v603 = vand.u32 %v576, 2147483648
    %v604 = vor.u32 1.1754944e-38, %v603
    %v605 = vsel %vm602, %v604, %v600
    %v606 = vmul.f32 %v570, %v605
    %607 = vrot.lane.b32.xlu0 %v119, 40
    %v608 = vpop.permute.xlu0 %607
    %609 = vrot.lane.b32.xlu0 %v122, 40
    %v610 = vpop.permute.xlu0 %609
    %v614 = vsel %vm168, %v591, 0
    %v617 = vsel %vm168, %v606, 0
    %619 = vmatpush.msra.mxu0 0.0
    %620 = vmatpush.msra.mxu0 0.0
    %621 = vmatpush.msra.mxu0 0.0
    %622 = vmatpush.msra.mxu0 0.0
    %623 = vmatpush.msra.mxu0 0.0
    %624 = vmatpush.msra.mxu0 0.0
    %625 = vmatpush.msra.mxu0 0.0
    %626 = vmatpush.msra.mxu0 0.0
    %627 = vmatpush.msra.mxu0 0.0
    %628 = vmatpush.msra.mxu0 0.0
    %629 = vmatpush.msra.mxu0 0.0
    %630 = vmatpush.msra.mxu0 0.0
    %631 = vmatpush.msra.mxu0 0.0
    %632 = vmatpush.msra.mxu0 0.0
    %633 = vmatpush.msra.mxu0 %v610
    %634 = vmatpush.msra.mxu0 %v608
    %635 = vmatmul.f32.gmra.mxu0 %v614
    %v636 = vpop.f32.mrf.mxu0
    %v637 = vadd.f32 0.0, %v636
    %638 = vmatmul.f32.gmra.mxu0 %v617
    %v639 = vpop.f32.mrf.mxu0
    %v640 = vadd.f32 0.0, %v639
    %641 = vdwg.mxu0
    %644 = vrot.lane.b32.xlu0 %v637, 24
    %v645 = vpop.permute.xlu0 %644
    %646 = vrot.lane.b32.xlu0 %v640, 24
    %v647 = vpop.permute.xlu0 %646
    %vm650 = vcmask 261312
    %651 = vst.msk [vmem:[#allocation2] sm:$0xff] %vm650, %v645
    %652 = vst.msk [vmem:[#allocation2 + $0x8] sm:$0xff] %vm650, %v647
    %v653 = vld [vmem:[#allocation2] sm:$0xff]
    %v654 = vld [vmem:[#allocation2 + $0x8] sm:$0xff]
    %v655 = vld [vmem:[#allocation8] sm:$0xff]
    %v656 = vld [vmem:[#allocation8 + $0x8] sm:$0xff]
    %v657 = vld [vmem:[#allocation8 + $0x10] sm:$0xff]
    %v658 = vld [vmem:[#allocation8 + $0x18] sm:$0xff]
    %v659 = vld [vmem:[%s3] sm:$0x1]
    %v661 = vperm.slane %v659, 0
    %662 = vrot.lane.b32.xlu0 %v661, 32
    %v663 = vpop.permute.xlu0 %662
    %v666 = vsel %vm94, %v653, 0
    %v669 = vsel %vm94, %v654, 0
    %671 = vmatpush.msra.mxu0 0.0
    %672 = vmatpush.msra.mxu0 0.0
    %673 = vmatpush.msra.mxu0 0.0
    %674 = vmatpush.msra.mxu0 0.0
    %675 = vmatpush.msra.mxu0 0.0
    %676 = vmatpush.msra.mxu0 0.0
    %677 = vmatpush.msra.mxu0 0.0
    %678 = vmatpush.msra.mxu0 0.0
    %679 = vmatpush.msra.mxu0 0.0
    %680 = vmatpush.msra.mxu0 0.0
    %681 = vmatpush.msra.mxu0 0.0
    %682 = vmatpush.msra.mxu0 0.0
    %683 = vmatpush.msra.mxu0 %v658
    %684 = vmatpush.msra.mxu0 %v657
    %685 = vmatpush.msra.mxu0 %v656
    %686 = vmatpush.msra.mxu0 %v655
    %687 = vmatmul.f32.gmra.mxu0 %v666
    %v688 = vpop.f32.mrf.mxu0
    %v689 = vadd.f32 %v663, %v688
    %690 = vmatmul.f32.gmra.mxu0 %v669
    %v691 = vpop.f32.mrf.mxu0
    %v692 = vadd.f32 %v663, %v691
    %693 = vdwg.mxu0
    %694 = vst.msk [vmem:[#allocation11] sm:$0xff] %vm94, %v689
    %695 = vst.msk [vmem:[#allocation11 + $0x8] sm:$0xff] %vm94, %v692
    // Predicated region
    $region38: #{tpu_custom_call.1} parent=1 // pred_check
      _
    $region39: #{tpu_custom_call.1} parent=1 // pred_check_branch
      %697 = sbr.rel (0) target = $region41
    $region40: #{tpu_custom_call.1} parent=1 // pred_region
      %699 = vsyncadd [#allocation5], 0
      %s700 = sshll.u32 [#allocation11], 4
      %s701 = int_to_ptr.vmem [resolvable:$true] %s700
      %s702 = sshll.u32 %s5, 4
      %s703 = int_to_ptr.hbm [resolvable:$true] %s702
      %708 = dma.vmem_to_hbm [thread:$0]  %s701, 256, %s703, [#allocation5], 128, 128, 8
    $region41: #{tpu_custom_call.1} parent=1 // pred_fallthru
      _
    // Predicated region
    $region42: #{tpu_custom_call.1} parent=1 // pred_check
      _
    $region43: #{tpu_custom_call.1} parent=1 // pred_check_branch
      %710 = sbr.rel (0) target = $region45
    $region44: #{tpu_custom_call.1} parent=1 // pred_region
      %712 = dma.done [#allocation5], 256
    $region45: #{tpu_custom_call.1} parent=1 // pred_fallthru
      _
    %713 = vsyncpa [#allocation4], 1
    %714 = vsyncpa [#allocation7], 1
    %715 = vsyncpa [#allocation10], 1
    %716 = vsyncpa [#allocation5], 1

</llo_original>
